<compile_context>
chip_gen: v7x
topology: tpu7x:2x2x1
jax: 0.10.0
libtpu: 0.0.40
codegen_flags: <defaults>
</compile_context>

<pallas_src>
import jax
import jax.numpy as jnp
import numpy as np
from jax.experimental import pallas as pl
from jax.experimental.pallas import tpu as pltpu


def _value_mlp_kernel(x_ref, w1_ref, b1_ref, w2_ref, b2_ref, w3r_ref, b3_ref, o_ref):
    # x_ref: (tb, obs_dim) batch tile (f32 or bf16); weights stay VMEM-resident
    # across the grid. Upcast to f32 (no-op for f32 input, cheap VPU cast for
    # bf16) so all accumulation/activation math is f32.
    x = x_ref[...].astype(jnp.float32)
    h1 = jnp.dot(x, w1_ref[...], preferred_element_type=jnp.float32) + b1_ref[...]
    h1 = jnp.maximum(h1, 0.0)                       # ReLU
    h2 = jnp.dot(h1, w2_ref[...], preferred_element_type=jnp.float32) + b2_ref[...]
    h2 = jnp.maximum(h2, 0.0)                       # ReLU
    # Final Linear(H, 1): contract the (1, H) weight row against h2's H axis so
    # the per-tile result is a lane-dense (1, tb) row (no (tb, 1) column output,
    # no masked partial stores, no transpose).
    row = jax.lax.dot_general(
        w3r_ref[...], h2,
        dimension_numbers=(((1,), (1,)), ((), ())),
        preferred_element_type=jnp.float32,
    )                                               # (1, tb)
    o_ref[0] = row + b3_ref[0]                      # b3 is an SMEM scalar


def _split(batch, block_rows):
    """Pick (tile_rows, num_main_tiles, tail_rows) for the batch axis.

    * B < 256: single unpadded tile of exactly B rows (latency path; a block
      equal to the full array dims is always layout-legal).
    * Otherwise: tile ~B/2 rounded down to a multiple of 8, capped at
      block_rows, so the main grid has >= 2 "parallel" steps (keeps both v7x
      TensorCores busy) and the ragged remainder (< tile_rows) goes to a tiny
      second call instead of padding the whole obs array.
    """
    if batch < 256:
        return batch, 1, 0
    tb = min(block_rows, max(8, (batch // 2) // 8 * 8))
    n = batch // tb
    return tb, n, batch - n * tb


def _mlp_call(obs, params, *, tb, num_tiles):
    """One pallas_call over the first num_tiles*tb rows of obs."""
    _, obs_dim = obs.shape
    H = params["w1"].shape[1]
    w1, b1 = params["w1"], params["b1"]
    w2, b2 = params["w2"], params["b2"]
    w3_row = params["w3"].reshape(1, H)   # (H, 1) -> (1, H)
    b3 = params["b3"].reshape(1)          # (1, 1) -> (1,) scalar for SMEM

    rows = num_tiles * tb
    obs_itemsize = jnp.dtype(obs.dtype).itemsize
    weight_bytes = sum(int(np.prod(a.shape)) * 4 for a in (w1, b1, w2, b2, w3_row, b3))
    cost = pl.CostEstimate(
        flops=2 * rows * (obs_dim * H + H * H + H),
        transcendentals=0,
        bytes_accessed=rows * obs_dim * obs_itemsize + rows * 4 + weight_bytes,
    )

    def resident(shape):
        # Same block every grid step -> stays VMEM-resident, no re-DMA.
        return pl.BlockSpec(shape, lambda i: (0, 0))

    return pl.pallas_call(
        _value_mlp_kernel,
        out_shape=jax.ShapeDtypeStruct((num_tiles, 1, tb), jnp.float32),
        grid=(num_tiles,),
        in_specs=[
            # obs tile (double-buffered by the pipeline). Rows beyond
            # num_tiles*tb of the passed array are simply never DMA'd.
            pl.BlockSpec((tb, obs_dim), lambda i: (i, 0)),
            resident(w1.shape),
            resident(b1.shape),
            resident(w2.shape),
            resident(b2.shape),
            resident(w3_row.shape),
            pl.BlockSpec(memory_space=pltpu.MemorySpace.SMEM),  # b3 scalar
        ],
        out_specs=pl.BlockSpec((1, 1, tb), lambda i: (i, 0, 0)),
        compiler_params=pltpu.CompilerParams(
            dimension_semantics=("parallel",),   # batch axis -> megacore on v7x
        ),
        cost_estimate=cost,
    )(obs, w1, b1, w2, b2, w3_row, b3)


def value_network_forward(obs, params, *, block_rows=2048, use_bf16=False):
    """obs: (B, obs_dim) f32. params: dict of w1,b1,w2,b2,w3,b3. Returns (B, 1) f32.

    use_bf16=True halves the dominant obs HBM traffic (accumulation stays f32);
    results then match the f32 reference only to ~1e-2 relative.
    """
    B, _ = obs.shape
    tb, num_tiles, tail = _split(B, block_rows)

    obs_in = obs.astype(jnp.bfloat16) if use_bf16 else obs

    # Main call: full obs array passed, grid covers rows [0, num_tiles*tb).
    main = _mlp_call(obs_in, params, tb=tb, num_tiles=num_tiles)
    main = main.reshape(num_tiles * tb, 1)   # row-major flatten == batch order
    if tail == 0:
        return main

    # Ragged tail (< tb rows): tiny single-tile call on an unpadded slice
    # (slice copy is only tail*obs_dim*itemsize bytes -- negligible).
    tail_obs = jax.lax.slice_in_dim(obs_in, num_tiles * tb, B, axis=0)
    tail_out = _mlp_call(tail_obs, params, tb=tail, num_tiles=1).reshape(tail, 1)
    return jnp.concatenate([main, tail_out], axis=0)


def init_params(obs_dim, hidden_dim, key):
    """Deterministic PyTorch-Linear-style init: U(-1/sqrt(fan_in), 1/sqrt(fan_in))."""
    ks = jax.random.split(key, 6)

    def linear(kw, kb, fan_in, fan_out):
        bound = 1.0 / np.sqrt(fan_in)
        w = jax.random.uniform(kw, (fan_in, fan_out), jnp.float32, -bound, bound)
        b = jax.random.uniform(kb, (1, fan_out), jnp.float32, -bound, bound)
        return w, b

    w1, b1 = linear(ks[0], ks[1], obs_dim, hidden_dim)
    w2, b2 = linear(ks[2], ks[3], hidden_dim, hidden_dim)
    w3, b3 = linear(ks[4], ks[5], hidden_dim, 1)
    return {"w1": w1, "b1": b1, "w2": w2, "b2": b2, "w3": w3, "b3": b3}


def _reference_forward(obs, p):
    h1 = jnp.maximum(obs @ p["w1"] + p["b1"], 0.0)
    h2 = jnp.maximum(h1 @ p["w2"] + p["b2"], 0.0)
    return h2 @ p["w3"] + p["b3"]


if __name__ == "__main__":
    key = jax.random.PRNGKey(0)
    k_p, k_a, k_b, k_c = jax.random.split(key, 4)

    obs_dim, hidden_dim = 24, 32
    params = init_params(obs_dim, hidden_dim, k_p)

    # 1) Tiny batch: single unpadded tile of exactly 8 rows (latency path).
    obs_a = jax.random.normal(k_a, (8, obs_dim), dtype=jnp.float32)
    out_a = jax.block_until_ready(value_network_forward(obs_a, params))
    np.testing.assert_allclose(np.asarray(out_a),
                               np.asarray(_reference_forward(obs_a, params)),
                               rtol=1e-5, atol=1e-5)
    assert out_a.shape == (8, 1)

    # 2) Mid batch: two-tile "parallel" grid (144-row tiles) + 12-row ragged tail.
    obs_b = jax.random.normal(k_b, (300, obs_dim), dtype=jnp.float32)
    out_b = jax.block_until_ready(value_network_forward(obs_b, params))
    np.testing.assert_allclose(np.asarray(out_b),
                               np.asarray(_reference_forward(obs_b, params)),
                               rtol=1e-5, atol=1e-5)
    assert out_b.shape == (300, 1)

    # 3) Large ragged batch: 2048-row tiles + 404-row tail, f32 and bf16 paths.
    obs_c = jax.random.normal(k_c, (4500, obs_dim), dtype=jnp.float32)
    ref_c = _reference_forward(obs_c, params)
    out_c = jax.block_until_ready(value_network_forward(obs_c, params))
    np.testing.assert_allclose(np.asarray(out_c), np.asarray(ref_c),
                               rtol=1e-5, atol=1e-5)
    assert out_c.shape == (4500, 1)

    out_c_bf16 = jax.block_until_ready(
        value_network_forward(obs_c, params, use_bf16=True))
    np.testing.assert_allclose(np.asarray(out_c_bf16), np.asarray(ref_c),
                               rtol=5e-2, atol=5e-2)

    print("KERNEL_OK")
</pallas_src>

<mosaic_0001>
module attributes {stable_mosaic.version = 11 : i64} {
  func.func @_value_mlp_kernel(%arg0: i32, %arg1: memref<8x24xf32, #tpu.memory_space<vmem>>, %arg2: memref<24x32xf32, #tpu.memory_space<vmem>>, %arg3: memref<1x32xf32, #tpu.memory_space<vmem>>, %arg4: memref<32x32xf32, #tpu.memory_space<vmem>>, %arg5: memref<1x32xf32, #tpu.memory_space<vmem>>, %arg6: memref<1x32xf32, #tpu.memory_space<vmem>>, %arg7: memref<1xf32, #tpu.memory_space<smem>>, %arg8: memref<1x1x8xf32, #tpu.memory_space<vmem>>) attributes {dimension_semantics = [#tpu.dimension_semantics<parallel>], iteration_bounds = array<i64: 1>, scalar_prefetch = 0 : i64, scratch_operands = 0 : i64, tpu.core_type = #tpu.core_type<tc>, window_params = [{transform_indices = @transform_0, window_bounds = array<i64: 8, 24>}, {pipeline_mode = #tpu.pipeline_mode<synchronous>, transform_indices = @transform_1, window_bounds = array<i64: 24, 32>}, {pipeline_mode = #tpu.pipeline_mode<synchronous>, transform_indices = @transform_2, window_bounds = array<i64: 1, 32>}, {pipeline_mode = #tpu.pipeline_mode<synchronous>, transform_indices = @transform_3, window_bounds = array<i64: 32, 32>}, {pipeline_mode = #tpu.pipeline_mode<synchronous>, transform_indices = @transform_4, window_bounds = array<i64: 1, 32>}, {pipeline_mode = #tpu.pipeline_mode<synchronous>, transform_indices = @transform_5, window_bounds = array<i64: 1, 32>}, {transform_indices = @transform_6, window_bounds = array<i64: 1>}, {transform_indices = @transform_7, window_bounds = array<i64: 1, 1, 8>}]} {
    %c0 = arith.constant 0 : index
    %c0_0 = arith.constant 0 : index
    %0 = vector.load %arg1[%c0, %c0_0] : memref<8x24xf32, #tpu.memory_space<vmem>>, vector<8x24xf32>
    %c0_1 = arith.constant 0 : index
    %c0_2 = arith.constant 0 : index
    %1 = vector.load %arg2[%c0_1, %c0_2] : memref<24x32xf32, #tpu.memory_space<vmem>>, vector<24x32xf32>
    %cst = arith.constant dense<0.000000e+00> : vector<8x32xf32>
    %2 = tpu.matmul %0, %1, %cst {dimension_numbers = #tpu.dot_dimension_numbers<[1], [0], [0], [1], [0, 0, 1, 1], [], []>} : vector<8x24xf32>, vector<24x32xf32>, vector<8x32xf32> -> vector<8x32xf32>
    %c0_3 = arith.constant 0 : index
    %c0_4 = arith.constant 0 : index
    %3 = vector.load %arg3[%c0_3, %c0_4] : memref<1x32xf32, #tpu.memory_space<vmem>>, vector<1x32xf32>
    %4 = vector.broadcast %3 : vector<1x32xf32> to vector<8x32xf32>
    %5 = arith.addf %2, %4 : vector<8x32xf32>
    %cst_5 = arith.constant 0.000000e+00 : f32
    %6 = vector.broadcast %cst_5 : f32 to vector<8x32xf32>
    %7 = arith.maximumf %5, %6 : vector<8x32xf32>
    %c0_6 = arith.constant 0 : index
    %c0_7 = arith.constant 0 : index
    %8 = vector.load %arg4[%c0_6, %c0_7] : memref<32x32xf32, #tpu.memory_space<vmem>>, vector<32x32xf32>
    %cst_8 = arith.constant dense<0.000000e+00> : vector<8x32xf32>
    %9 = tpu.matmul %7, %8, %cst_8 {dimension_numbers = #tpu.dot_dimension_numbers<[1], [0], [0], [1], [0, 0, 1, 1], [], []>} : vector<8x32xf32>, vector<32x32xf32>, vector<8x32xf32> -> vector<8x32xf32>
    %c0_9 = arith.constant 0 : index
    %c0_10 = arith.constant 0 : index
    %10 = vector.load %arg5[%c0_9, %c0_10] : memref<1x32xf32, #tpu.memory_space<vmem>>, vector<1x32xf32>
    %11 = vector.broadcast %10 : vector<1x32xf32> to vector<8x32xf32>
    %12 = arith.addf %9, %11 : vector<8x32xf32>
    %cst_11 = arith.constant 0.000000e+00 : f32
    %13 = vector.broadcast %cst_11 : f32 to vector<8x32xf32>
    %14 = arith.maximumf %12, %13 : vector<8x32xf32>
    %c0_12 = arith.constant 0 : index
    %c0_13 = arith.constant 0 : index
    %15 = vector.load %arg6[%c0_12, %c0_13] : memref<1x32xf32, #tpu.memory_space<vmem>>, vector<1x32xf32>
    %cst_14 = arith.constant dense<0.000000e+00> : vector<1x8xf32>
    %16 = tpu.matmul %15, %14, %cst_14 {dimension_numbers = #tpu.dot_dimension_numbers<[1], [1], [0], [0], [0, 0, 1, 0], [], []>} : vector<1x32xf32>, vector<8x32xf32>, vector<1x8xf32> -> vector<1x8xf32>
    %c0_15 = arith.constant 0 : index
    %17 = memref.load %arg7[%c0_15] : memref<1xf32, #tpu.memory_space<smem>>
    %18 = vector.broadcast %17 : f32 to vector<1x8xf32>
    %19 = arith.addf %16, %18 : vector<1x8xf32>
    %c0_16 = arith.constant 0 : index
    %c0_17 = arith.constant 0 : index
    %c0_18 = arith.constant 0 : index
    %20 = vector.load %arg8[%c0_16, %c0_17, %c0_18] : memref<1x1x8xf32, #tpu.memory_space<vmem>>, vector<1x1x8xf32>
    %21 = vector.shape_cast %20 : vector<1x1x8xf32> to vector<1x8xf32>
    %22 = vector.shape_cast %19 : vector<1x8xf32> to vector<1x1x8xf32>
    tpu.vector_store %arg8[%c0_16, %c0_17, %c0_18], %22 {strides = array<i32>} : memref<1x1x8xf32, #tpu.memory_space<vmem>>, vector<1x1x8xf32>,
    return
  }
  func.func @transform_0(%arg0: i32) -> (i32, i32) {
    %c0_i32 = arith.constant 0 : i32
    %c0_i32_0 = arith.constant 0 : i32
    return %arg0, %c0_i32 : i32, i32
  }
  func.func @transform_1(%arg0: i32) -> (i32, i32) {
    %c0_i32 = arith.constant 0 : i32
    %c0_i32_0 = arith.constant 0 : i32
    %c0_i32_1 = arith.constant 0 : i32
    return %c0_i32, %c0_i32_0 : i32, i32
  }
  func.func @transform_2(%arg0: i32) -> (i32, i32) {
    %c0_i32 = arith.constant 0 : i32
    %c0_i32_0 = arith.constant 0 : i32
    %c0_i32_1 = arith.constant 0 : i32
    return %c0_i32, %c0_i32_0 : i32, i32
  }
  func.func @transform_3(%arg0: i32) -> (i32, i32) {
    %c0_i32 = arith.constant 0 : i32
    %c0_i32_0 = arith.constant 0 : i32
    %c0_i32_1 = arith.constant 0 : i32
    return %c0_i32, %c0_i32_0 : i32, i32
  }
  func.func @transform_4(%arg0: i32) -> (i32, i32) {
    %c0_i32 = arith.constant 0 : i32
    %c0_i32_0 = arith.constant 0 : i32
    %c0_i32_1 = arith.constant 0 : i32
    return %c0_i32, %c0_i32_0 : i32, i32
  }
  func.func @transform_5(%arg0: i32) -> (i32, i32) {
    %c0_i32 = arith.constant 0 : i32
    %c0_i32_0 = arith.constant 0 : i32
    %c0_i32_1 = arith.constant 0 : i32
    return %c0_i32, %c0_i32_0 : i32, i32
  }
  func.func @transform_6(%arg0: i32) -> i32 {
    %c0_i32 = arith.constant 0 : i32
    %c0_i32_0 = arith.constant 0 : i32
    return %c0_i32 : i32
  }
  func.func @transform_7(%arg0: i32) -> (i32, i32, i32) {
    %c0_i32 = arith.constant 0 : i32
    %c0_i32_0 = arith.constant 0 : i32
    %c0_i32_1 = arith.constant 0 : i32
    return %arg0, %c0_i32, %c0_i32_0 : i32, i32, i32
  }
}

</mosaic_0001>

<llo_original>
// kernel: tpu_custom_call.1
$region0: #{tpu_custom_call.1}
  #allocation0 [shape = 'u32[]', space=smem, size = 0x4, offset = 0x4, fixed_abs, tag = 'smem constant byte address 0x4 - core index']
  #allocation1 [shape = 'u32[144,128]{1,0:T(1,128)}', space=vmem, size = 0x12000, scoped, tag = 'internal scratch']
  #allocation2 [shape = 'f32[1]{0:T(128)S(6)}', space=smem, size = 0x200, scoped, tag = 'scoped memory for tpu_custom_call.1']
  %s0 = inlined_call_operand.hbm [shape: f32[8,24], index: 0, kind: input, shape index: {}]
  %s1 = inlined_call_operand.hbm [shape: f32[24,32], index: 1, kind: input, shape index: {}]
  %s2 = inlined_call_operand.vmem [shape: f32[1,32], index: 2, kind: input, shape index: {}]
  %s3 = inlined_call_operand.hbm [shape: f32[32,32], index: 3, kind: input, shape index: {}]
  %s4 = inlined_call_operand.vmem [shape: f32[1,32], index: 4, kind: input, shape index: {}]
  %s5 = inlined_call_operand.vmem [shape: f32[1,32], index: 5, kind: input, shape index: {}]
  %s6 = inlined_call_operand.<no memory space> [shape: f32[1], index: 6, kind: input, shape index: {}]
  %s7 = inlined_call_operand.hbm [shape: f32[1,1,8], index: 7, kind: output, shape index: {}]
  %s8 = sld [smem:[#allocation0]]
  $region50: #{tpu_custom_call.1} parent=0
    _
  %s10 = ssub.s32 1, %s8
  %s11 = scalar_select 0, %s10, %s8
  %12 = sst [smem:[#allocation2]] %s6
  $region1: #{tpu_custom_call.1} parent=0
    #allocation3 [shape = 'u8[4096]{0}', space=vmem, size = 0x1000, scoped, tag = 'input window, operand 0, single buffered']
    #allocation4 [shape = 's32[1]{0}', space=sflag, size = 0x4, scoped, tag = 'scoped memory for tpu_custom_call.1']
    #allocation5 [shape = 's32[1]{0}', space=sflag, size = 0x4, scoped, tag = 'scoped memory for tpu_custom_call.1']
    #allocation6 [shape = 'u8[12288]{0}', space=vmem, size = 0x3000, scoped, tag = 'input window, operand 1, single buffered']
    #allocation7 [shape = 's32[1]{0}', space=sflag, size = 0x4, scoped, tag = 'scoped memory for tpu_custom_call.1']
    #allocation8 [shape = 'u8[16384]{0}', space=vmem, size = 0x4000, scoped, tag = 'input window, operand 3, single buffered']
    #allocation9 [shape = 'u8[512]{0}', space=vmem, size = 0x400, scoped, tag = 'output window, operand 0, single buffered']
    %13 = vsyncpa [#allocation4], 0
    %14 = vsyncpa [#allocation7], 0
    %15 = vsyncpa [#allocation5], 0
    // Predicated region
    $region2: #{tpu_custom_call.1} parent=1 // pred_check
      _
    $region3: #{tpu_custom_call.1} parent=1 // pred_check_branch
      %17 = sbr.rel (0) target = $region5
    $region4: #{tpu_custom_call.1} parent=1 // pred_region
      %s19 = ssub.s32 128, 128
      %20 = vsyncadd [#allocation4], %s19
      %s22 = sshll.u32 [#allocation3], 4
      %s23 = int_to_ptr.vmem [resolvable:$true] %s22
      %25 = dma.hbm_to_vmem [thread:$0]  %s0, 128, %s23, [#allocation4]
    $region5: #{tpu_custom_call.1} parent=1 // pred_fallthru
      _
    // Predicated region
    $region6: #{tpu_custom_call.1} parent=1 // pred_check
      _
    $region7: #{tpu_custom_call.1} parent=1 // pred_check_branch
      %27 = sbr.rel (0) target = $region9
    $region8: #{tpu_custom_call.1} parent=1 // pred_region
      %s29 = ssub.s32 384, 384
      %30 = vsyncadd [#allocation7], %s29
      %s31 = sshll.u32 [#allocation6], 4
      %s32 = int_to_ptr.vmem [resolvable:$true] %s31
      %37 = dma.hbm_to_vmem [thread:$0]  %s1, 384, %s32, [#allocation7], 128, 128, 8
    $region9: #{tpu_custom_call.1} parent=1 // pred_fallthru
      _
    // Predicated region
    $region10: #{tpu_custom_call.1} parent=1 // pred_check
      _
    $region11: #{tpu_custom_call.1} parent=1 // pred_check_branch
      %39 = sbr.rel (0) target = $region13
    $region12: #{tpu_custom_call.1} parent=1 // pred_region
      _
    $region13: #{tpu_custom_call.1} parent=1 // pred_fallthru
      _
    // Predicated region
    $region14: #{tpu_custom_call.1} parent=1 // pred_check
      _
    $region15: #{tpu_custom_call.1} parent=1 // pred_check_branch
      %41 = sbr.rel (0) target = $region17
    $region16: #{tpu_custom_call.1} parent=1 // pred_region
      %s43 = ssub.s32 512, 512
      %44 = vsyncadd [#allocation7], %s43
      %s45 = sshll.u32 [#allocation8], 4
      %s46 = int_to_ptr.vmem [resolvable:$true] %s45
      %51 = dma.hbm_to_vmem [thread:$0]  %s3, 512, %s46, [#allocation7], 128, 128, 8
    $region17: #{tpu_custom_call.1} parent=1 // pred_fallthru
      _
    // Predicated region
    $region18: #{tpu_custom_call.1} parent=1 // pred_check
      _
    $region19: #{tpu_custom_call.1} parent=1 // pred_check_branch
      %53 = sbr.rel (0) target = $region21
    $region20: #{tpu_custom_call.1} parent=1 // pred_region
      _
    $region21: #{tpu_custom_call.1} parent=1 // pred_fallthru
      _
    // Predicated region
    $region22: #{tpu_custom_call.1} parent=1 // pred_check
      _
    $region23: #{tpu_custom_call.1} parent=1 // pred_check_branch
      %55 = sbr.rel (0) target = $region25
    $region24: #{tpu_custom_call.1} parent=1 // pred_region
      _
    $region25: #{tpu_custom_call.1} parent=1 // pred_fallthru
      _
    // Predicated region
    $region26: #{tpu_custom_call.1} parent=1 // pred_check
      _
    $region27: #{tpu_custom_call.1} parent=1 // pred_check_branch
      %57 = sbr.rel (0) target = $region29
    $region28: #{tpu_custom_call.1} parent=1 // pred_region
      _
    $region29: #{tpu_custom_call.1} parent=1 // pred_fallthru
      _
    // Predicated region
    $region30: #{tpu_custom_call.1} parent=1 // pred_check
      _
    $region31: #{tpu_custom_call.1} parent=1 // pred_check_branch
      %59 = sbr.rel (0) target = $region33
    $region32: #{tpu_custom_call.1} parent=1 // pred_region
      %60 = dma.done [#allocation4], 128
    $region33: #{tpu_custom_call.1} parent=1 // pred_fallthru
      _
    // Predicated region
    $region34: #{tpu_custom_call.1} parent=1 // pred_check
      _
    $region35: #{tpu_custom_call.1} parent=1 // pred_check_branch
      %62 = sbr.rel (0) target = $region37
    $region36: #{tpu_custom_call.1} parent=1 // pred_region
      %63 = dma.done [#allocation7], 384
    $region37: #{tpu_custom_call.1} parent=1 // pred_fallthru
      _
    // Predicated region
    $region38: #{tpu_custom_call.1} parent=1 // pred_check
      _
    $region39: #{tpu_custom_call.1} parent=1 // pred_check_branch
      %65 = sbr.rel (0) target = $region41
    $region40: #{tpu_custom_call.1} parent=1 // pred_region
      %66 = dma.done [#allocation7], 512
    $region41: #{tpu_custom_call.1} parent=1 // pred_fallthru
      _
    %v67 = vld [vmem:[#allocation3] sm:$0xff]
    %v68 = vld [vmem:[#allocation6] sm:$0xff]
    %v69 = vld [vmem:[#allocation6 + $0x8] sm:$0xff]
    %v70 = vld [vmem:[#allocation6 + $0x10] sm:$0xff]
    %v71 = vld [vmem:[%s2] sm:$0x1]
    %v73 = vlaneseq
    %v74 = vshrl.u32 %v73, 7
    %v75 = vsub.s32 0, %v74
    %v76 = vrot.slane %v71, %v75
    %vm78 = vcmask 195584
    %v80 = vsel %vm78, %v67, 0
    %82 = vmatprep.subr.mxu0 0.0
    %83 = vmatpush1.msra.mxu0 %v68
    %84 = vmatprep.subr.mxu0 0.0
    %85 = vmatpush1.msra.mxu0 %v69
    %86 = vmatprep.subr.mxu0 0.0
    %87 = vmatpush1.msra.mxu0 %v70
    %88 = vmatprep.subr.mxu0 0.0
    %89 = vmatpush1.msra.mxu0 0.0
    %90 = vmatprep.subr.mxu0 0.0
    %91 = vmatpush1.msra.mxu0 0.0
    %92 = vmatprep.subr.mxu0 0.0
    %93 = vmatpush1.msra.mxu0 0.0
    %94 = vmatprep.subr.mxu0 0.0
    %95 = vmatpush1.msra.mxu0 0.0
    %96 = vmatprep.subr.mxu0 0.0
    %97 = vmatpush1.msra.mxu0 0.0
    %98 = vmatprep.subr.mxu0 0.0
    %99 = vmatpush1.msra.mxu0 0.0
    %100 = vmatprep.subr.mxu0 0.0
    %101 = vmatpush1.msra.mxu0 0.0
    %102 = vmatprep.subr.mxu0 0.0
    %103 = vmatpush1.msra.mxu0 0.0
    %104 = vmatprep.subr.mxu0 0.0
    %105 = vmatpush1.msra.mxu0 0.0
    %106 = vmatprep.subr.mxu0 0.0
    %107 = vmatpush1.msra.mxu0 0.0
    %108 = vmatprep.subr.mxu0 0.0
    %109 = vmatpush1.msra.mxu0 0.0
    %110 = vmatprep.subr.mxu0 0.0
    %111 = vmatpush1.msra.mxu0 0.0
    %112 = vmatprep.subr.mxu0 0.0
    %113 = vmatpush1.msra.mxu0 0.0
    %114 = vmatprep.subr.mxu0 0.0
    %115 = vmatpush1.msra.mxu0 0.0
    %116 = vmatprep.subr.mxu0 0.0
    %117 = vmatpush1.msra.mxu0 0.0
    %118 = vmatprep.subr.mxu0 0.0
    %119 = vmatpush1.msra.mxu0 0.0
    %120 = vmatprep.subr.mxu0 0.0
    %121 = vmatpush1.msra.mxu0 0.0
    %122 = vmatprep.subr.mxu0 0.0
    %123 = vmatpush1.msra.mxu0 0.0
    %124 = vmatprep.subr.mxu0 0.0
    %125 = vmatpush1.msra.mxu0 0.0
    %126 = vmatprep.subr.mxu0 0.0
    %127 = vmatpush1.msra.mxu0 0.0
    %128 = vmatprep.subr.mxu0 0.0
    %129 = vmatpush1.msra.mxu0 0.0
    %130 = vmatprep.subr.mxu0 0.0
    %131 = vmatpush1.msra.mxu0 0.0
    %132 = vmatprep.subr.mxu0 0.0
    %133 = vmatpush1.msra.mxu0 0.0
    %134 = vmatprep.subr.mxu0 0.0
    %135 = vmatpush1.msra.mxu0 0.0
    %136 = vmatprep.subr.mxu0 0.0
    %137 = vmatpush1.msra.mxu0 0.0
    %138 = vmatprep.subr.mxu0 0.0
    %139 = vmatpush1.msra.mxu0 0.0
    %140 = vmatprep.subr.mxu0 0.0
    %141 = vmatpush1.msra.mxu0 0.0
    %142 = vmatprep.subr.mxu0 0.0
    %143 = vmatpush1.msra.mxu0 0.0
    %144 = vmatprep.subr.mxu0 0.0
    %145 = vmatpush1.msra.mxu0 0.0
    %146 = vmatprep.mubr.f32.mxu0 0.0
    %147 = vmatmul.mubr.f32.gmra.mrb[0].mxu0 %v80
    %v148 = vpop.f32.mrb[0].mxu0
    %v149 = vadd.f32 %v76, %v148
    %v150 = vpop.f32.mrb[0].mxu0
    %151 = vdwg.mxu0
    %v152 = vmax.f32 %v149, 0.0
    %v153 = vld [vmem:[#allocation8] sm:$0xff]
    %v154 = vld [vmem:[#allocation8 + $0x8] sm:$0xff]
    %v155 = vld [vmem:[#allocation8 + $0x10] sm:$0xff]
    %v156 = vld [vmem:[#allocation8 + $0x18] sm:$0xff]
    %v157 = vld [vmem:[%s4] sm:$0x1]
    %v159 = vlaneseq
    %v160 = vshrl.u32 %v159, 7
    %v161 = vsub.s32 0, %v160
    %v162 = vrot.slane %v157, %v161
    %vm164 = vcmask 261120
    %v166 = vsel %vm164, %v152, 0
    %168 = vmatprep.subr.mxu0 0.0
    %169 = vmatpush1.msra.mxu0 %v153
    %170 = vmatprep.subr.mxu0 0.0
    %171 = vmatpush1.msra.mxu0 %v154
    %172 = vmatprep.subr.mxu0 0.0
    %173 = vmatpush1.msra.mxu0 %v155
    %174 = vmatprep.subr.mxu0 0.0
    %175 = vmatpush1.msra.mxu0 %v156
    %176 = vmatprep.subr.mxu0 0.0
    %177 = vmatpush1.msra.mxu0 0.0
    %178 = vmatprep.subr.mxu0 0.0
    %179 = vmatpush1.msra.mxu0 0.0
    %180 = vmatprep.subr.mxu0 0.0
    %181 = vmatpush1.msra.mxu0 0.0
    %182 = vmatprep.subr.mxu0 0.0
    %183 = vmatpush1.msra.mxu0 0.0
    %184 = vmatprep.subr.mxu0 0.0
    %185 = vmatpush1.msra.mxu0 0.0
    %186 = vmatprep.subr.mxu0 0.0
    %187 = vmatpush1.msra.mxu0 0.0
    %188 = vmatprep.subr.mxu0 0.0
    %189 = vmatpush1.msra.mxu0 0.0
    %190 = vmatprep.subr.mxu0 0.0
    %191 = vmatpush1.msra.mxu0 0.0
    %192 = vmatprep.subr.mxu0 0.0
    %193 = vmatpush1.msra.mxu0 0.0
    %194 = vmatprep.subr.mxu0 0.0
    %195 = vmatpush1.msra.mxu0 0.0
    %196 = vmatprep.subr.mxu0 0.0
    %197 = vmatpush1.msra.mxu0 0.0
    %198 = vmatprep.subr.mxu0 0.0
    %199 = vmatpush1.msra.mxu0 0.0
    %200 = vmatprep.subr.mxu0 0.0
    %201 = vmatpush1.msra.mxu0 0.0
    %202 = vmatprep.subr.mxu0 0.0
    %203 = vmatpush1.msra.mxu0 0.0
    %204 = vmatprep.subr.mxu0 0.0
    %205 = vmatpush1.msra.mxu0 0.0
    %206 = vmatprep.subr.mxu0 0.0
    %207 = vmatpush1.msra.mxu0 0.0
    %208 = vmatprep.subr.mxu0 0.0
    %209 = vmatpush1.msra.mxu0 0.0
    %210 = vmatprep.subr.mxu0 0.0
    %211 = vmatpush1.msra.mxu0 0.0
    %212 = vmatprep.subr.mxu0 0.0
    %213 = vmatpush1.msra.mxu0 0.0
    %214 = vmatprep.subr.mxu0 0.0
    %215 = vmatpush1.msra.mxu0 0.0
    %216 = vmatprep.subr.mxu0 0.0
    %217 = vmatpush1.msra.mxu0 0.0
    %218 = vmatprep.subr.mxu0 0.0
    %219 = vmatpush1.msra.mxu0 0.0
    %220 = vmatprep.subr.mxu0 0.0
    %221 = vmatpush1.msra.mxu0 0.0
    %222 = vmatprep.subr.mxu0 0.0
    %223 = vmatpush1.msra.mxu0 0.0
    %224 = vmatprep.subr.mxu0 0.0
    %225 = vmatpush1.msra.mxu0 0.0
    %226 = vmatprep.subr.mxu0 0.0
    %227 = vmatpush1.msra.mxu0 0.0
    %228 = vmatprep.subr.mxu0 0.0
    %229 = vmatpush1.msra.mxu0 0.0
    %230 = vmatprep.subr.mxu0 0.0
    %231 = vmatpush1.msra.mxu0 0.0
    %232 = vmatprep.mubr.f32.mxu0 0.0
    %233 = vmatmul.mubr.f32.gmra.mrb[0].mxu0 %v166
    %v234 = vpop.f32.mrb[0].mxu0
    %v235 = vadd.f32 %v162, %v234
    %v236 = vpop.f32.mrb[0].mxu0
    %237 = vdwg.mxu0
    %v238 = vmax.f32 %v235, 0.0
    %v239 = vld [vmem:[%s5] sm:$0x1]
    %s240 = sld [smem:[#allocation2]]
    %v241 = vstv %s240
    %v243 = vsel %vm164, %v239, 0
    %v246 = vsel %vm164, %v238, 0
    %248 = vmatprep.subr.mxu0 0.0
    %249 = vmatpush1.xpose.msra.mxu0 %v246
    %250 = vmatprep.subr.mxu0 0.0
    %251 = vmatpush1.xpose.msra.mxu0 0.0
    %252 = vmatprep.subr.mxu0 0.0
    %253 = vmatpush1.xpose.msra.mxu0 0.0
    %254 = vmatprep.subr.mxu0 0.0
    %255 = vmatpush1.xpose.msra.mxu0 0.0
    %256 = vmatprep.subr.mxu0 0.0
    %257 = vmatpush1.xpose.msra.mxu0 0.0
    %258 = vmatprep.subr.mxu0 0.0
    %259 = vmatpush1.xpose.msra.mxu0 0.0
    %260 = vmatprep.subr.mxu0 0.0
    %261 = vmatpush1.xpose.msra.mxu0 0.0
    %262 = vmatprep.subr.mxu0 0.0
    %263 = vmatpush1.xpose.msra.mxu0 0.0
    %264 = vmatprep.subr.mxu0 0.0
    %265 = vmatpush1.xpose.msra.mxu0 0.0
    %266 = vmatprep.subr.mxu0 0.0
    %267 = vmatpush1.xpose.msra.mxu0 0.0
    %268 = vmatprep.subr.mxu0 0.0
    %269 = vmatpush1.xpose.msra.mxu0 0.0
    %270 = vmatprep.subr.mxu0 0.0
    %271 = vmatpush1.xpose.msra.mxu0 0.0
    %272 = vmatprep.subr.mxu0 0.0
    %273 = vmatpush1.xpose.msra.mxu0 0.0
    %274 = vmatprep.subr.mxu0 0.0
    %275 = vmatpush1.xpose.msra.mxu0 0.0
    %276 = vmatprep.subr.mxu0 0.0
    %277 = vmatpush1.xpose.msra.mxu0 0.0
    %278 = vmatprep.subr.mxu0 0.0
    %279 = vmatpush1.xpose.msra.mxu0 0.0
    %280 = vmatprep.subr.mxu0 0.0
    %281 = vmatpush1.xpose.msra.mxu0 0.0
    %282 = vmatprep.subr.mxu0 0.0
    %283 = vmatpush1.xpose.msra.mxu0 0.0
    %284 = vmatprep.subr.mxu0 0.0
    %285 = vmatpush1.xpose.msra.mxu0 0.0
    %286 = vmatprep.subr.mxu0 0.0
    %287 = vmatpush1.xpose.msra.mxu0 0.0
    %288 = vmatprep.subr.mxu0 0.0
    %289 = vmatpush1.xpose.msra.mxu0 0.0
    %290 = vmatprep.subr.mxu0 0.0
    %291 = vmatpush1.xpose.msra.mxu0 0.0
    %292 = vmatprep.subr.mxu0 0.0
    %293 = vmatpush1.xpose.msra.mxu0 0.0
    %294 = vmatprep.subr.mxu0 0.0
    %295 = vmatpush1.xpose.msra.mxu0 0.0
    %296 = vmatprep.subr.mxu0 0.0
    %297 = vmatpush1.xpose.msra.mxu0 0.0
    %298 = vmatprep.subr.mxu0 0.0
    %299 = vmatpush1.xpose.msra.mxu0 0.0
    %300 = vmatprep.subr.mxu0 0.0
    %301 = vmatpush1.xpose.msra.mxu0 0.0
    %302 = vmatprep.subr.mxu0 0.0
    %303 = vmatpush1.xpose.msra.mxu0 0.0
    %304 = vmatprep.subr.mxu0 0.0
    %305 = vmatpush1.xpose.msra.mxu0 0.0
    %306 = vmatprep.subr.mxu0 0.0
    %307 = vmatpush1.xpose.msra.mxu0 0.0
    %308 = vmatprep.subr.mxu0 0.0
    %309 = vmatpush1.xpose.msra.mxu0 0.0
    %310 = vmatprep.subr.mxu0 0.0
    %311 = vmatpush1.xpose.msra.mxu0 0.0
    %312 = vmatprep.mubr.f32.mxu0 0.0
    %313 = vmatmul.mubr.f32.gmra.mrb[0].mxu0 %v243
    %v314 = vpop.f32.mrb[0].mxu0
    %v315 = vadd.f32 %v241, %v314
    %v316 = vpop.f32.mrb[0].mxu0
    %317 = vdwg.mxu0
    %vm318 = vcmask 57344
    %319 = vst.msk [vmem:[#allocation9] sm:$0x1] %vm318, %v315
    // Predicated region
    $region42: #{tpu_custom_call.1} parent=1 // pred_check
      _
    $region43: #{tpu_custom_call.1} parent=1 // pred_check_branch
      %321 = sbr.rel (0) target = $region45
    $region44: #{tpu_custom_call.1} parent=1 // pred_region
      %s323 = ssub.s32 16, 16
      %324 = vsyncadd [#allocation5], %s323
      %s326 = sshll.u32 [#allocation9], 4
      %s327 = int_to_ptr.vmem [resolvable:$true] %s326
      %329 = dma.vmem_to_hbm [thread:$0]  %s327, 16, %s7, [#allocation5]
    $region45: #{tpu_custom_call.1} parent=1 // pred_fallthru
      _
    // Predicated region
    $region46: #{tpu_custom_call.1} parent=1 // pred_check
      _
    $region47: #{tpu_custom_call.1} parent=1 // pred_check_branch
      %331 = sbr.rel (0) target = $region49
    $region48: #{tpu_custom_call.1} parent=1 // pred_region
      %332 = dma.done [#allocation5], 16
    $region49: #{tpu_custom_call.1} parent=1 // pred_fallthru
      _
    %333 = vsyncpa [#allocation4], 1
    %334 = vsyncpa [#allocation7], 1
    %335 = vsyncpa [#allocation5], 1

</llo_original>
